<compile_context>
chip_gen: v7x
topology: tpu7x:2x2x1
jax: 0.10.0
libtpu: 0.0.40
codegen_flags: <defaults>
</compile_context>

<pallas_src>
import functools

import jax
import jax.numpy as jnp
from jax.experimental import pallas as pl
from jax.experimental.pallas import tpu as pltpu

_LANE = 128
_SMALL_N = 512


def _round_up(x, m):
    return ((x + m - 1) // m) * m


def _vmem_capacity_bytes():
    try:
        info = pltpu.get_tpu_info()
        return int(getattr(info, "vmem_capacity_bytes"))
    except Exception:
        return 64 * 1024 * 1024  # conservative (v7x per-TC VMEM)


# --------------------- small-graph kernels (single shot) ----------------------

def _small_ax_w_kernel(a_ref, x_ref, w_ref, b_ref, o_ref):
    ax = jnp.dot(a_ref[...], x_ref[...], preferred_element_type=jnp.float32)
    y = jnp.dot(ax.astype(w_ref.dtype), w_ref[...],
                preferred_element_type=jnp.float32) + b_ref[...]
    o_ref[...] = jnp.maximum(y, 0.0).astype(o_ref.dtype)


def _small_a_xw_kernel(a_ref, z_ref, b_ref, o_ref):
    y = jnp.dot(a_ref[...], z_ref[...],
                preferred_element_type=jnp.float32) + b_ref[...]
    o_ref[...] = jnp.maximum(y, 0.0).astype(o_ref.dtype)


# ------------- large-graph kernels (A tiled, f32 VMEM accumulator) ------------

def _tiled_ax_w_resident_kernel(a_ref, x_ref, w_ref, b_ref, o_ref, acc_ref, *, tk):
    """acc += A_tile @ x[k*tk:(k+1)*tk]; finalize with @W(bf16) + b, relu."""
    k = pl.program_id(1)

    @pl.when(k == 0)
    def _init():
        acc_ref[...] = jnp.zeros_like(acc_ref)

    xk = x_ref[pl.ds(pl.multiple_of(k * tk, tk), tk), :]
    acc_ref[...] += jnp.dot(a_ref[...], xk, preferred_element_type=jnp.float32)

    @pl.when(k == pl.num_programs(1) - 1)
    def _finalize():
        y = jnp.dot(acc_ref[...].astype(w_ref.dtype), w_ref[...],
                    preferred_element_type=jnp.float32) + b_ref[...]
        o_ref[...] = jnp.maximum(y, 0.0).astype(o_ref.dtype)


def _tiled_ax_w_streamed_kernel(a_ref, x_ref, w_ref, b_ref, o_ref, acc_ref):
    """Fallback when x does not fit VMEM: x streamed as (tk, Kp) tiles."""
    k = pl.program_id(1)

    @pl.when(k == 0)
    def _init():
        acc_ref[...] = jnp.zeros_like(acc_ref)

    acc_ref[...] += jnp.dot(a_ref[...], x_ref[...],
                            preferred_element_type=jnp.float32)

    @pl.when(k == pl.num_programs(1) - 1)
    def _finalize():
        y = jnp.dot(acc_ref[...].astype(w_ref.dtype), w_ref[...],
                    preferred_element_type=jnp.float32) + b_ref[...]
        o_ref[...] = jnp.maximum(y, 0.0).astype(o_ref.dtype)


def _tiled_a_xw_resident_kernel(a_ref, z_ref, b_ref, o_ref, acc_ref, *, tk):
    """acc += A_tile @ z[k*tk:(k+1)*tk] with z = x@W precomputed; then +b, relu."""
    k = pl.program_id(1)

    @pl.when(k == 0)
    def _init():
        acc_ref[...] = jnp.zeros_like(acc_ref)

    zk = z_ref[pl.ds(pl.multiple_of(k * tk, tk), tk), :]
    acc_ref[...] += jnp.dot(a_ref[...], zk, preferred_element_type=jnp.float32)

    @pl.when(k == pl.num_programs(1) - 1)
    def _finalize():
        o_ref[...] = jnp.maximum(acc_ref[...] + b_ref[...], 0.0).astype(o_ref.dtype)


def _tiled_a_xw_streamed_kernel(a_ref, z_ref, b_ref, o_ref, acc_ref):
    k = pl.program_id(1)

    @pl.when(k == 0)
    def _init():
        acc_ref[...] = jnp.zeros_like(acc_ref)

    acc_ref[...] += jnp.dot(a_ref[...], z_ref[...],
                            preferred_element_type=jnp.float32)

    @pl.when(k == pl.num_programs(1) - 1)
    def _finalize():
        o_ref[...] = jnp.maximum(acc_ref[...] + b_ref[...], 0.0).astype(o_ref.dtype)


# ----------------------------------- module -----------------------------------

class GraphConvTPU:
    """Pallas-TPU GraphConv: y = relu((A @ x) @ W + b).

    Mirrors the PyTorch module: A, W, b are fixed at construction (the padded
    bf16 adjacency — the dominant HBM stream — is built exactly once); x is the
    per-call input.
    """

    def __init__(self, A, w, b, *, stream_dtype=jnp.bfloat16):
        A = jnp.asarray(A, jnp.float32)
        w = jnp.asarray(w, jnp.float32)
        b = jnp.asarray(b, jnp.float32)
        N, N2 = A.shape
        assert N == N2, "adjacency must be square"
        input_dim, output_dim = w.shape

        self.N, self.input_dim, self.output_dim = N, input_dim, output_dim
        self.stream_dtype = stream_dtype
        self.Kp = _round_up(input_dim, _LANE)
        self.Op = _round_up(output_dim, _LANE)
        # Cheaper order A @ (x @ W) when the output is narrower than the input.
        self.xw_first = output_dim < input_dim
        self.w_f32 = w

        if N <= _SMALL_N:
            # Small graphs: one-shot kernel, pad N only to a sublane multiple.
            self.small = True
            self.Np = _round_up(max(N, 8), 8)
        else:
            # Large graphs: tm=512 keeps grid[0] >= 2 (megacore); tk chosen so
            # the bf16 A tile is 0.5-2 MiB and Np stays a multiple of tk.
            self.small = False
            self.Np = _round_up(N, 512)
            self.tm = 512
            if self.Np % 2048 == 0:
                self.tk = 2048
            elif self.Np % 1024 == 0:
                self.tk = 1024
            else:
                self.tk = 512

        Np, Kp, Op = self.Np, self.Kp, self.Op

        # Pre-pad + pre-cast static parameters ONCE.
        # (The f32 and bf16 adjacency coexist briefly in HBM; acceptable here.)
        self.A_p = (jnp.zeros((Np, Np), stream_dtype)
                    .at[:N, :N].set(A.astype(stream_dtype)))
        self.b_p = (jnp.zeros((1, Op), jnp.float32)
                    .at[0, :output_dim].set(b))
        if not self.xw_first:
            # W is VMEM-resident in the kernel; bf16 halves its footprint and
            # makes the finalize matmul native-MXU on all generations.
            self.w_p = (jnp.zeros((Kp, Op), stream_dtype)
                        .at[:input_dim, :output_dim].set(w.astype(stream_dtype)))

        if not self.small:
            cap = _vmem_capacity_bytes()
            # ~96 MiB on v5e/v6e (128 MiB physical), ~48 MiB on v7x (64 MiB).
            self.vmem_limit = max(32 * 1024 * 1024,
                                  min(int(cap * 0.75), 96 * 1024 * 1024))
            rhs_w = Op if self.xw_first else Kp
            est = (2 * self.tm * self.tk * 2            # A double buffer (bf16)
                   + 2 * Np * rhs_w * 2                  # resident features (x2, conservative)
                   + (0 if self.xw_first else 2 * Kp * Op * 2)   # W (bf16)
                   + self.tm * Op * 4                    # f32 accumulator
                   + 2 * self.tm * Op * 4                # output double buffer
                   + 2 * 1024 * 1024)                    # headroom
            self.resident_rhs = est <= self.vmem_limit

    def __call__(self, x):
        x = jnp.asarray(x, jnp.float32)
        N, Np, Kp, Op = self.N, self.Np, self.Kp, self.Op
        sd = self.stream_dtype

        # Per-call feature operand (small relative to A).
        if self.xw_first:
            # Tiny (N,in)@(in,out) matmul done in plain XLA f32.
            z = x @ self.w_f32
            rhs = (jnp.zeros((Np, Op), sd)
                   .at[:N, :self.output_dim].set(z.astype(sd)))
            rhs_w = Op
        else:
            rhs = (jnp.zeros((Np, Kp), sd)
                   .at[:N, :self.input_dim].set(x.astype(sd)))
            rhs_w = Kp

        if self.small:
            vmem = pl.BlockSpec(memory_space=pltpu.MemorySpace.VMEM)
            if self.xw_first:
                out = pl.pallas_call(
                    _small_a_xw_kernel,
                    out_shape=jax.ShapeDtypeStruct((Np, Op), jnp.float32),
                    in_specs=[vmem, vmem, vmem],
                    out_specs=vmem,
                )(self.A_p, rhs, self.b_p)
            else:
                out = pl.pallas_call(
                    _small_ax_w_kernel,
                    out_shape=jax.ShapeDtypeStruct((Np, Op), jnp.float32),
                    in_specs=[vmem, vmem, vmem, vmem],
                    out_specs=vmem,
                )(self.A_p, rhs, self.w_p, self.b_p)
            return out[:N, :self.output_dim]

        tm, tk = self.tm, self.tk
        grid = (Np // tm, Np // tk)

        a_spec = pl.BlockSpec((tm, tk), lambda i, k: (i, k))
        bias_spec = pl.BlockSpec((1, Op), lambda i, k: (0, 0))
        out_spec = pl.BlockSpec((tm, Op), lambda i, k: (i, 0))
        if self.resident_rhs:
            # Whole feature matrix resident in VMEM (constant index -> one DMA).
            rhs_spec = pl.BlockSpec((Np, rhs_w), lambda i, k: (0, 0))
        else:
            rhs_spec = pl.BlockSpec((tk, rhs_w), lambda i, k: (k, 0))

        flops = 2 * Np * Np * rhs_w
        bytes_accessed = (self.A_p.size * 2 + Np * rhs_w * 2
                          + Np * Op * 4 + Op * 4)
        if not self.xw_first:
            flops += 2 * Np * Kp * Op
            bytes_accessed += Kp * Op * 2

        compiler_params = pltpu.CompilerParams(
            dimension_semantics=("parallel", "arbitrary"),
            vmem_limit_bytes=self.vmem_limit,
        )

        if self.xw_first:
            kernel = (functools.partial(_tiled_a_xw_resident_kernel, tk=tk)
                      if self.resident_rhs else _tiled_a_xw_streamed_kernel)
            in_specs = [a_spec, rhs_spec, bias_spec]
            operands = (self.A_p, rhs, self.b_p)
        else:
            kernel = (functools.partial(_tiled_ax_w_resident_kernel, tk=tk)
                      if self.resident_rhs else _tiled_ax_w_streamed_kernel)
            w_spec = pl.BlockSpec((Kp, Op), lambda i, k: (0, 0))
            in_specs = [a_spec, rhs_spec, w_spec, bias_spec]
            operands = (self.A_p, rhs, self.w_p, self.b_p)

        out = pl.pallas_call(
            kernel,
            out_shape=jax.ShapeDtypeStruct((Np, Op), jnp.float32),
            grid_spec=pl.GridSpec(
                grid=grid,
                in_specs=in_specs,
                out_specs=out_spec,
                scratch_shapes=[pltpu.VMEM((tm, Op), jnp.float32)],
            ),
            compiler_params=compiler_params,
            cost_estimate=pl.CostEstimate(
                flops=int(flops), transcendentals=0,
                bytes_accessed=int(bytes_accessed)),
        )(*operands)
        return out[:N, :self.output_dim]


# ----------------------------------- tests ------------------------------------

def _rel_err(a, b):
    return jnp.max(jnp.abs(a - b)) / (jnp.max(jnp.abs(b)) + 1e-12)


def _ref_bf16_path(A, x, w, b, xw_first):
    """Reference mirroring the kernel's bf16-streamed math path (f32 accum)."""
    bf = lambda t: t.astype(jnp.bfloat16).astype(jnp.float32)
    A_bf = bf(A)
    if xw_first:
        z_bf = bf(x @ w)
        return jnp.maximum(A_bf @ z_bf + b, 0.0)
    ax = A_bf @ bf(x)
    return jnp.maximum(bf(ax) @ bf(w) + b, 0.0)


if __name__ == "__main__":
    key = jax.random.PRNGKey(0)

    # --- Test 1: module demo shapes, small path, (A@x)@W ordering ---
    N, in_d, out_d = 16, 32, 64
    k_a, k_x, k_w, k_b, key = jax.random.split(key, 5)
    A = jax.random.normal(k_a, (N, N), dtype=jnp.float32)
    x = jax.random.normal(k_x, (N, in_d), dtype=jnp.float32)
    w = jax.random.normal(k_w, (in_d, out_d), dtype=jnp.float32)
    b = jax.random.normal(k_b, (out_d,), dtype=jnp.float32)

    gcn = GraphConvTPU(A, w, b)
    y = jax.block_until_ready(gcn(x))
    assert y.shape == (N, out_d)
    assert _rel_err(y, _ref_bf16_path(A, x, w, b, gcn.xw_first)) < 2e-2
    assert _rel_err(y, jnp.maximum((A @ x) @ w + b, 0.0)) < 5e-2

    # --- Test 2: small path, A@(x@W) ordering (output narrower than input) ---
    N2, in2, out2 = 64, 128, 32
    k_a, k_x, k_w, k_b, key = jax.random.split(key, 5)
    A2 = jax.random.normal(k_a, (N2, N2), dtype=jnp.float32)
    x2 = jax.random.normal(k_x, (N2, in2), dtype=jnp.float32)
    w2 = jax.random.normal(k_w, (in2, out2), dtype=jnp.float32)
    b2 = jax.random.normal(k_b, (out2,), dtype=jnp.float32)

    gcn2 = GraphConvTPU(A2, w2, b2)
    y2 = jax.block_until_ready(gcn2(x2))
    assert y2.shape == (N2, out2)
    assert _rel_err(y2, _ref_bf16_path(A2, x2, w2, b2, gcn2.xw_first)) < 2e-2
    assert _rel_err(y2, jnp.maximum((A2 @ x2) @ w2 + b2, 0.0)) < 5e-2

    # --- Test 3: large/streamed path (tiled A, resident features, padding) ---
    N3, in3, out3 = 3000, 64, 96
    k_a, k_x, k_w, k_b, key = jax.random.split(key, 5)
    A3 = jax.random.normal(k_a, (N3, N3), dtype=jnp.float32) / 32.0
    x3 = jax.random.normal(k_x, (N3, in3), dtype=jnp.float32)
    w3 = jax.random.normal(k_w, (in3, out3), dtype=jnp.float32)
    b3 = jax.random.normal(k_b, (out3,), dtype=jnp.float32)

    gcn3 = GraphConvTPU(A3, w3, b3)
    y3 = jax.block_until_ready(gcn3(x3))
    assert y3.shape == (N3, out3)
    assert _rel_err(y3, _ref_bf16_path(A3, x3, w3, b3, gcn3.xw_first)) < 2e-2
    assert _rel_err(y3, jnp.maximum((A3 @ x3) @ w3 + b3, 0.0)) < 5e-2

    print("KERNEL_OK")
</pallas_src>

<mosaic_0001>
module attributes {stable_mosaic.version = 11 : i64} {
  func.func @_small_ax_w_kernel(%arg0: memref<16x16xbf16, #tpu.memory_space<vmem>>, %arg1: memref<16x128xbf16, #tpu.memory_space<vmem>>, %arg2: memref<128x128xbf16, #tpu.memory_space<vmem>>, %arg3: memref<1x128xf32, #tpu.memory_space<vmem>>, %arg4: memref<16x128xf32, #tpu.memory_space<vmem>>) attributes {dimension_semantics = [], scalar_prefetch = 0 : i64, scratch_operands = 0 : i64, tpu.core_type = #tpu.core_type<tc>} {
    %c0 = arith.constant 0 : index
    %c0_0 = arith.constant 0 : index
    %0 = vector.load %arg0[%c0, %c0_0] : memref<16x16xbf16, #tpu.memory_space<vmem>>, vector<16x16xbf16>
    %c0_1 = arith.constant 0 : index
    %c0_2 = arith.constant 0 : index
    %1 = vector.load %arg1[%c0_1, %c0_2] : memref<16x128xbf16, #tpu.memory_space<vmem>>, vector<16x128xbf16>
    %cst = arith.constant dense<0.000000e+00> : vector<16x128xf32>
    %2 = tpu.matmul %0, %1, %cst {dimension_numbers = #tpu.dot_dimension_numbers<[1], [0], [0], [1], [0, 0, 1, 1], [], []>} : vector<16x16xbf16>, vector<16x128xbf16>, vector<16x128xf32> -> vector<16x128xf32>
    %3 = arith.truncf %2 : vector<16x128xf32> to vector<16x128xbf16>
    %c0_3 = arith.constant 0 : index
    %c0_4 = arith.constant 0 : index
    %4 = vector.load %arg2[%c0_3, %c0_4] : memref<128x128xbf16, #tpu.memory_space<vmem>>, vector<128x128xbf16>
    %cst_5 = arith.constant dense<0.000000e+00> : vector<16x128xf32>
    %5 = tpu.matmul %3, %4, %cst_5 {dimension_numbers = #tpu.dot_dimension_numbers<[1], [0], [0], [1], [0, 0, 1, 1], [], []>} : vector<16x128xbf16>, vector<128x128xbf16>, vector<16x128xf32> -> vector<16x128xf32>
    %c0_6 = arith.constant 0 : index
    %c0_7 = arith.constant 0 : index
    %6 = vector.load %arg3[%c0_6, %c0_7] : memref<1x128xf32, #tpu.memory_space<vmem>>, vector<1x128xf32>
    %7 = vector.broadcast %6 : vector<1x128xf32> to vector<16x128xf32>
    %8 = arith.addf %5, %7 : vector<16x128xf32>
    %cst_8 = arith.constant 0.000000e+00 : f32
    %9 = vector.broadcast %cst_8 : f32 to vector<16x128xf32>
    %10 = arith.maximumf %8, %9 : vector<16x128xf32>
    %c0_9 = arith.constant 0 : index
    %c0_10 = arith.constant 0 : index
    %11 = vector.load %arg4[%c0_9, %c0_10] : memref<16x128xf32, #tpu.memory_space<vmem>>, vector<16x128xf32>
    tpu.vector_store %arg4[%c0_9, %c0_10], %10 {strides = array<i32>} : memref<16x128xf32, #tpu.memory_space<vmem>>, vector<16x128xf32>,
    return
  }
}

</mosaic_0001>

<llo_original>
// kernel: tpu_custom_call.1
$region0: #{tpu_custom_call.1}
  #allocation0 [shape = 'u32[]', space=smem, size = 0x4, offset = 0x4, fixed_abs, tag = 'smem constant byte address 0x4 - core index']
  #allocation1 [shape = 'u32[144,128]{1,0:T(1,128)}', space=vmem, size = 0x12000, scoped, tag = 'internal scratch']
  %s0 = inlined_call_operand.hbm [shape: bf16[16,16], index: 0, kind: input, shape index: {}]
  %s1 = inlined_call_operand.hbm [shape: bf16[16,128], index: 1, kind: input, shape index: {}]
  %s2 = inlined_call_operand.hbm [shape: bf16[128,128], index: 2, kind: input, shape index: {}]
  %s3 = inlined_call_operand.vmem [shape: f32[1,128], index: 3, kind: input, shape index: {}]
  %s4 = inlined_call_operand.hbm [shape: f32[16,128], index: 4, kind: output, shape index: {}]
  %s5 = sld [smem:[#allocation0]]
  $region38: #{tpu_custom_call.1} parent=0
    _
  %s7 = ssub.s32 1, %s5
  %s8 = scalar_select 0, %s7, %s5
  $region1: #{tpu_custom_call.1} parent=0
    #allocation2 [shape = 'u8[4096]{0}', space=vmem, size = 0x1000, scoped, tag = 'input window, operand 0, single buffered']
    #allocation3 [shape = 's32[1]{0}', space=sflag, size = 0x4, scoped, tag = 'scoped memory for tpu_custom_call.1']
    #allocation4 [shape = 's32[1]{0}', space=sflag, size = 0x4, scoped, tag = 'scoped memory for tpu_custom_call.1']
    #allocation5 [shape = 'u8[4096]{0}', space=vmem, size = 0x1000, scoped, tag = 'input window, operand 1, single buffered']
    #allocation6 [shape = 's32[1]{0}', space=sflag, size = 0x4, scoped, tag = 'scoped memory for tpu_custom_call.1']
    #allocation7 [shape = 'u8[32768]{0}', space=vmem, size = 0x8000, scoped, tag = 'input window, operand 2, single buffered']
    #allocation8 [shape = 'u8[8192]{0}', space=vmem, size = 0x2000, scoped, tag = 'output window, operand 0, single buffered']
    %9 = vsyncpa [#allocation3], 0
    %10 = vsyncpa [#allocation6], 0
    %11 = vsyncpa [#allocation4], 0
    // Predicated region
    $region2: #{tpu_custom_call.1} parent=1 // pred_check
      _
    $region3: #{tpu_custom_call.1} parent=1 // pred_check_branch
      %13 = sbr.rel (0) target = $region5
    $region4: #{tpu_custom_call.1} parent=1 // pred_region
      %s15 = ssub.s32 128, 128
      %16 = vsyncadd [#allocation3], %s15
      %s17 = sshll.u32 [#allocation2], 4
      %s18 = int_to_ptr.vmem [resolvable:$true] %s17
      %23 = dma.hbm_to_vmem [thread:$0]  %s0, 128, %s18, [#allocation3], 64, 64, 4
    $region5: #{tpu_custom_call.1} parent=1 // pred_fallthru
      _
    // Predicated region
    $region6: #{tpu_custom_call.1} parent=1 // pred_check
      _
    $region7: #{tpu_custom_call.1} parent=1 // pred_check_branch
      %25 = sbr.rel (0) target = $region9
    $region8: #{tpu_custom_call.1} parent=1 // pred_region
      %s27 = ssub.s32 128, 128
      %28 = vsyncadd [#allocation6], %s27
      %s29 = sshll.u32 [#allocation5], 4
      %s30 = int_to_ptr.vmem [resolvable:$true] %s29
      %35 = dma.hbm_to_vmem [thread:$0]  %s1, 128, %s30, [#allocation6], 64, 64, 4
    $region9: #{tpu_custom_call.1} parent=1 // pred_fallthru
      _
    // Predicated region
    $region10: #{tpu_custom_call.1} parent=1 // pred_check
      _
    $region11: #{tpu_custom_call.1} parent=1 // pred_check_branch
      %37 = sbr.rel (0) target = $region13
    $region12: #{tpu_custom_call.1} parent=1 // pred_region
      %s39 = ssub.s32 1024, 1024
      %40 = vsyncadd [#allocation6], %s39
      %s41 = sshll.u32 [#allocation7], 4
      %s42 = int_to_ptr.vmem [resolvable:$true] %s41
      %47 = dma.hbm_to_vmem [thread:$0]  %s2, 1024, %s42, [#allocation6], 64, 64, 4
    $region13: #{tpu_custom_call.1} parent=1 // pred_fallthru
      _
    // Predicated region
    $region14: #{tpu_custom_call.1} parent=1 // pred_check
      _
    $region15: #{tpu_custom_call.1} parent=1 // pred_check_branch
      %49 = sbr.rel (0) target = $region17
    $region16: #{tpu_custom_call.1} parent=1 // pred_region
      _
    $region17: #{tpu_custom_call.1} parent=1 // pred_fallthru
      _
    // Predicated region
    $region18: #{tpu_custom_call.1} parent=1 // pred_check
      _
    $region19: #{tpu_custom_call.1} parent=1 // pred_check_branch
      %51 = sbr.rel (0) target = $region21
    $region20: #{tpu_custom_call.1} parent=1 // pred_region
      %52 = dma.done [#allocation3], 128
    $region21: #{tpu_custom_call.1} parent=1 // pred_fallthru
      _
    // Predicated region
    $region22: #{tpu_custom_call.1} parent=1 // pred_check
      _
    $region23: #{tpu_custom_call.1} parent=1 // pred_check_branch
      %54 = sbr.rel (0) target = $region25
    $region24: #{tpu_custom_call.1} parent=1 // pred_region
      %55 = dma.done [#allocation6], 128
    $region25: #{tpu_custom_call.1} parent=1 // pred_fallthru
      _
    // Predicated region
    $region26: #{tpu_custom_call.1} parent=1 // pred_check
      _
    $region27: #{tpu_custom_call.1} parent=1 // pred_check_branch
      %57 = sbr.rel (0) target = $region29
    $region28: #{tpu_custom_call.1} parent=1 // pred_region
      %58 = dma.done [#allocation6], 1024
    $region29: #{tpu_custom_call.1} parent=1 // pred_fallthru
      _
    %v60 = vld [vmem:[#allocation2] sm:$0xf]
    %v61 = vld [vmem:[#allocation2 + $0x4] sm:$0xf]
    %v62 = vld [vmem:[#allocation5] sm:$0xf]
    %v63 = vld [vmem:[#allocation5 + $0x4] sm:$0xf]
    %v66 = vunpack.c.l.b16 %v60
    %v67 = vunpack.c.l.b16 %v61
    %v68 = vpack.c.b16 %v67, %v66
    %v71 = vunpack.c.l.b16 %v62
    %v72 = vunpack.c.l.b16 %v63
    %v73 = vpack.c.b16 %v72, %v71
    %vm75 = vcmask 130048
    %v77 = vsel %vm75, %v68, 0
    %79 = vmatprep.subr.bf16.mxu0 0
    %80 = vmatpush1.bf16.msra.mxu0 %v73
    %81 = vmatprep.subr.bf16.mxu0 0
    %82 = vmatpush1.bf16.msra.mxu0 0
    %83 = vmatprep.subr.bf16.mxu0 0
    %84 = vmatpush1.bf16.msra.mxu0 0
    %85 = vmatprep.subr.bf16.mxu0 0
    %86 = vmatpush1.bf16.msra.mxu0 0
    %87 = vmatprep.subr.bf16.mxu0 0
    %88 = vmatpush1.bf16.msra.mxu0 0
    %89 = vmatprep.subr.bf16.mxu0 0
    %90 = vmatpush1.bf16.msra.mxu0 0
    %91 = vmatprep.subr.bf16.mxu0 0
    %92 = vmatpush1.bf16.msra.mxu0 0
    %93 = vmatprep.subr.bf16.mxu0 0
    %94 = vmatpush1.bf16.msra.mxu0 0
    %95 = vmatprep.subr.bf16.mxu0 0
    %96 = vmatpush1.bf16.msra.mxu0 0
    %97 = vmatprep.subr.bf16.mxu0 0
    %98 = vmatpush1.bf16.msra.mxu0 0
    %99 = vmatprep.subr.bf16.mxu0 0
    %100 = vmatpush1.bf16.msra.mxu0 0
    %101 = vmatprep.subr.bf16.mxu0 0
    %102 = vmatpush1.bf16.msra.mxu0 0
    %103 = vmatprep.subr.bf16.mxu0 0
    %104 = vmatpush1.bf16.msra.mxu0 0
    %105 = vmatprep.subr.bf16.mxu0 0
    %106 = vmatpush1.bf16.msra.mxu0 0
    %107 = vmatprep.subr.bf16.mxu0 0
    %108 = vmatpush1.bf16.msra.mxu0 0
    %109 = vmatprep.subr.bf16.mxu0 0
    %110 = vmatpush1.bf16.msra.mxu0 0
    %111 = vmatprep.mubr.bf16.mxu0 0
    %112 = vmatmul.mubr.bf16.gmra.mrb[0].mxu0 %v77
    %v113 = vpop.f32.mrb[0].mxu0
    %v114 = vadd.f32 0.0, %v113
    %v115 = vpop.f32.mrb[0].mxu0
    %v116 = vpop.f32.mrb[0].mxu0
    %v117 = vadd.f32 0.0, %v116
    %v118 = vpop.f32.mrb[0].mxu0
    %119 = vdwg.mxu0
    %v120 = vpack.c.bf16 %v117, %v114
    %v121 = vld [vmem:[#allocation7] sm:$0xf]
    %v122 = vld [vmem:[#allocation7 + $0x4] sm:$0xf]
    %v123 = vld [vmem:[#allocation7 + $0x8] sm:$0xf]
    %v124 = vld [vmem:[#allocation7 + $0xc] sm:$0xf]
    %v125 = vld [vmem:[#allocation7 + $0x10] sm:$0xf]
    %v126 = vld [vmem:[#allocation7 + $0x14] sm:$0xf]
    %v127 = vld [vmem:[#allocation7 + $0x18] sm:$0xf]
    %v128 = vld [vmem:[#allocation7 + $0x1c] sm:$0xf]
    %v129 = vld [vmem:[#allocation7 + $0x20] sm:$0xf]
    %v130 = vld [vmem:[#allocation7 + $0x24] sm:$0xf]
    %v131 = vld [vmem:[#allocation7 + $0x28] sm:$0xf]
    %v132 = vld [vmem:[#allocation7 + $0x2c] sm:$0xf]
    %v133 = vld [vmem:[#allocation7 + $0x30] sm:$0xf]
    %v134 = vld [vmem:[#allocation7 + $0x34] sm:$0xf]
    %v135 = vld [vmem:[#allocation7 + $0x38] sm:$0xf]
    %v136 = vld [vmem:[#allocation7 + $0x3c] sm:$0xf]
    %v137 = vld [vmem:[%s3] sm:$0x1]
    %v139 = vlaneseq
    %v140 = vshrl.u32 %v139, 7
    %v141 = vsub.s32 0, %v140
    %v142 = vrot.slane %v137, %v141
    %v160 = vunpack.c.l.b16 %v121
    %v161 = vunpack.c.l.b16 %v122
    %v162 = vunpack.c.l.b16 %v123
    %v163 = vunpack.c.l.b16 %v124
    %v164 = vunpack.c.l.b16 %v125
    %v165 = vunpack.c.l.b16 %v126
    %v166 = vunpack.c.l.b16 %v127
    %v167 = vunpack.c.l.b16 %v128
    %v168 = vunpack.c.l.b16 %v129
    %v169 = vunpack.c.l.b16 %v130
    %v170 = vunpack.c.l.b16 %v131
    %v171 = vunpack.c.l.b16 %v132
    %v172 = vunpack.c.l.b16 %v133
    %v173 = vunpack.c.l.b16 %v134
    %v174 = vunpack.c.l.b16 %v135
    %v175 = vunpack.c.l.b16 %v136
    %v176 = vpack.c.b16 %v161, %v160
    %v177 = vpack.c.b16 %v163, %v162
    %v178 = vpack.c.b16 %v165, %v164
    %v179 = vpack.c.b16 %v167, %v166
    %v180 = vpack.c.b16 %v169, %v168
    %v181 = vpack.c.b16 %v171, %v170
    %v182 = vpack.c.b16 %v173, %v172
    %v183 = vpack.c.b16 %v175, %v174
    %192 = vmatprep.subr.bf16.mxu0 0
    %193 = vmatpush1.bf16.msra.mxu0 %v176
    %194 = vmatprep.subr.bf16.mxu0 0
    %195 = vmatpush1.bf16.msra.mxu0 %v177
    %196 = vmatprep.subr.bf16.mxu0 0
    %197 = vmatpush1.bf16.msra.mxu0 %v178
    %198 = vmatprep.subr.bf16.mxu0 0
    %199 = vmatpush1.bf16.msra.mxu0 %v179
    %200 = vmatprep.subr.bf16.mxu0 0
    %201 = vmatpush1.bf16.msra.mxu0 %v180
    %202 = vmatprep.subr.bf16.mxu0 0
    %203 = vmatpush1.bf16.msra.mxu0 %v181
    %204 = vmatprep.subr.bf16.mxu0 0
    %205 = vmatpush1.bf16.msra.mxu0 %v182
    %206 = vmatprep.subr.bf16.mxu0 0
    %207 = vmatpush1.bf16.msra.mxu0 %v183
    %208 = vmatprep.subr.bf16.mxu0 0
    %209 = vmatpush1.bf16.msra.mxu0 0
    %210 = vmatprep.subr.bf16.mxu0 0
    %211 = vmatpush1.bf16.msra.mxu0 0
    %212 = vmatprep.subr.bf16.mxu0 0
    %213 = vmatpush1.bf16.msra.mxu0 0
    %214 = vmatprep.subr.bf16.mxu0 0
    %215 = vmatpush1.bf16.msra.mxu0 0
    %216 = vmatprep.subr.bf16.mxu0 0
    %217 = vmatpush1.bf16.msra.mxu0 0
    %218 = vmatprep.subr.bf16.mxu0 0
    %219 = vmatpush1.bf16.msra.mxu0 0
    %220 = vmatprep.subr.bf16.mxu0 0
    %221 = vmatpush1.bf16.msra.mxu0 0
    %222 = vmatprep.subr.bf16.mxu0 0
    %223 = vmatpush1.bf16.msra.mxu0 0
    %224 = vmatprep.mubr.bf16.mxu0 0
    %225 = vmatmul.mubr.bf16.gmra.mrb[0].mxu0 %v120
    %v226 = vpop.f32.mrb[0].mxu0
    %v227 = vadd.f32 %v142, %v226
    %v228 = vpop.f32.mrb[0].mxu0
    %v229 = vpop.f32.mrb[0].mxu0
    %v230 = vadd.f32 %v142, %v229
    %v231 = vpop.f32.mrb[0].mxu0
    %232 = vdwg.mxu0
    %v233 = vmax.f32 %v227, 0.0
    %v234 = vmax.f32 %v230, 0.0
    %235 = vst [vmem:[#allocation8] sm:$0xff] %v233
    %236 = vst [vmem:[#allocation8 + $0x8] sm:$0xff] %v234
    // Predicated region
    $region30: #{tpu_custom_call.1} parent=1 // pred_check
      _
    $region31: #{tpu_custom_call.1} parent=1 // pred_check_branch
      %238 = sbr.rel (0) target = $region33
    $region32: #{tpu_custom_call.1} parent=1 // pred_region
      %s240 = ssub.s32 256, 256
      %241 = vsyncadd [#allocation4], %s240
      %s242 = sshll.u32 [#allocation8], 4
      %s243 = int_to_ptr.vmem [resolvable:$true] %s242
      %248 = dma.vmem_to_hbm [thread:$0]  %s243, 256, %s4, [#allocation4], 128, 128, 8
    $region33: #{tpu_custom_call.1} parent=1 // pred_fallthru
      _
    // Predicated region
    $region34: #{tpu_custom_call.1} parent=1 // pred_check
      _
    $region35: #{tpu_custom_call.1} parent=1 // pred_check_branch
      %250 = sbr.rel (0) target = $region37
    $region36: #{tpu_custom_call.1} parent=1 // pred_region
      %251 = dma.done [#allocation4], 256
    $region37: #{tpu_custom_call.1} parent=1 // pred_fallthru
      _
    %252 = vsyncpa [#allocation3], 1
    %253 = vsyncpa [#allocation6], 1
    %254 = vsyncpa [#allocation4], 1

</llo_original>
